<compile_context>
chip_gen: v6e
topology: v6e:2x2x1
jax: 0.10.0
libtpu: 0.0.40
codegen_flags: <defaults>
</compile_context>

<pallas_src>
import functools

import jax
import jax.numpy as jnp
from jax.experimental import pallas as pl
from jax.experimental.pallas import tpu as pltpu

LANES = 128
SUBLANES = 8


def _huber_sum_kernel(x_ref, t_ref, o_ref, acc_ref, *, delta, rows, tile_r,
                      steps_per_core, needs_mask):
    c = pl.program_id(0)
    i = pl.program_id(1)

    @pl.when(i == 0)
    def _init():
        acc_ref[...] = jnp.zeros_like(acc_ref)

    x = x_ref[...].astype(jnp.float32)
    t = t_ref[...].astype(jnp.float32)
    diff = jnp.abs(x - t)
    # Branch-free Huber: clipped = min(diff, delta);
    #   loss = 0.5*clipped^2 + delta*(diff - clipped)
    # (identical to the where() form; delta multiplies fold for delta=1.0).
    clipped = jnp.minimum(diff, delta)
    loss = 0.5 * clipped * clipped + delta * (diff - clipped)

    def fold(v):
        # Tile-aligned reshape: per-step accumulation stays on the VPU,
        # folding the tile down to one (8, 128) vreg of partial sums.
        return v.reshape(tile_r // SUBLANES, SUBLANES, LANES).sum(axis=0)

    if needs_mask:
        start_row = (c * steps_per_core + i) * tile_r
        tile_is_partial = start_row + tile_r > rows

        @pl.when(jnp.logical_not(tile_is_partial))
        def _full_tile():
            acc_ref[...] += fold(loss)

        @pl.when(tile_is_partial)
        def _partial_tile():
            # Rows past `rows` are block overhang (undefined data); discard
            # with a where (NOT a multiply: garbage*0 would propagate NaN).
            row_ids = start_row + jax.lax.broadcasted_iota(
                jnp.int32, (tile_r, 1), 0)
            acc_ref[...] += fold(jnp.where(row_ids < rows, loss, 0.0))
    else:
        acc_ref[...] += fold(loss)

    @pl.when(i == pl.num_programs(1) - 1)
    def _fin():
        # Single cross-lane/sublane reduction + (1,1) store per core.
        o_ref[...] = jnp.sum(acc_ref[...]).reshape(1, 1)


def _tpu_defaults():
    """Generation-aware defaults: (tile_rows, num_cores)."""
    kind = ""
    try:
        dev = jax.devices()[0]
        if dev.platform == "tpu":
            kind = str(getattr(dev, "device_kind", "")).lower()
    except Exception:
        pass
    if "v7" in kind:          # v7x: 3.2 TB/s HBM, 2 TensorCores per chip
        return 8192, 2
    return 4096, 1            # v5e / v6e: single TC, smaller tiles suffice


def huber_loss(input_arr, target_arr, delta=1.0, tile_rows=None,
               num_cores=None):
    """Mean Huber loss over all elements (matches torch HuberLoss.forward)."""
    assert input_arr.shape == target_arr.shape
    n_elems = input_arr.size
    if n_elems == 0:
        return jnp.float32(jnp.nan)  # same as mean over an empty tensor

    def_tile, def_cores = _tpu_defaults()
    if tile_rows is None:
        tile_rows = def_tile
    if num_cores is None:
        num_cores = def_cores

    x = input_arr.reshape(-1)
    t = target_arr.reshape(-1)

    # Packed sublane tile: f32 -> 8 rows, bf16 -> 16, int8/fp8 -> 32.
    itemsize = max(1, jnp.dtype(input_arr.dtype).itemsize)
    sublane_mult = SUBLANES * max(1, 4 // itemsize)

    # Pad ONLY when needed to form the (rows, 128) lane-dense view (ragged
    # n % 128 != 0) or when the array is tinier than one packed tile.  Zero
    # padding on both inputs contributes exactly zero loss.
    n_padded = max(-(-n_elems // LANES) * LANES, LANES * sublane_mult)
    pad = n_padded - n_elems
    if pad:
        x = jnp.pad(x, (0, pad))
        t = jnp.pad(t, (0, pad))

    rows = n_padded // LANES
    x = x.reshape(rows, LANES)      # free reshape (no data movement)
    t = t.reshape(rows, LANES)

    # Tile rows: multiple of the packed sublane tile, never exceeding the
    # array's whole packed-row count, capped so 2 inputs x 2 pipeline buffers
    # stay well under the VMEM limit on every generation.
    tile_r = min(int(tile_rows), (rows // sublane_mult) * sublane_mult, 8192)
    tile_r = max(sublane_mult, (tile_r // sublane_mult) * sublane_mult)

    total_steps = pl.cdiv(rows, tile_r)
    if num_cores > 1 and total_steps < num_cores:
        num_cores = 1
    steps_per_core = pl.cdiv(total_steps, num_cores)
    coverage_rows = num_cores * steps_per_core * tile_r
    needs_mask = coverage_rows != rows

    # Clamp logical step -> block index so no DMA block starts past the array
    # (duplicate reads of the last block are fully masked out in-kernel).
    last_block = total_steps - 1
    spc = steps_per_core

    def in_map(c, i):
        return (jnp.minimum(c * spc + i, last_block), 0)

    kernel = functools.partial(
        _huber_sum_kernel,
        delta=float(delta),
        rows=rows,
        tile_r=tile_r,
        steps_per_core=steps_per_core,
        needs_mask=needs_mask,
    )

    cost = pl.CostEstimate(
        flops=6 * n_elems,
        transcendentals=0,
        bytes_accessed=int(x.nbytes) + int(t.nbytes) + 4 * num_cores,
    )

    partials = pl.pallas_call(
        kernel,
        out_shape=jax.ShapeDtypeStruct((num_cores, 1), jnp.float32),
        grid_spec=pltpu.PrefetchScalarGridSpec(
            num_scalar_prefetch=0,
            grid=(num_cores, steps_per_core),
            in_specs=[
                pl.BlockSpec((tile_r, LANES), in_map),
                pl.BlockSpec((tile_r, LANES), in_map),
            ],
            # Each core writes its own (1,1) partial sum: no write race.
            out_specs=pl.BlockSpec((1, 1), lambda c, i: (c, 0)),
            scratch_shapes=[pltpu.VMEM((SUBLANES, LANES), jnp.float32)],
        ),
        compiler_params=pltpu.CompilerParams(
            dimension_semantics=("parallel", "arbitrary"),
            vmem_limit_bytes=32 * 1024 * 1024,
        ),
        cost_estimate=cost,
    )(x, t)

    total = jnp.sum(partials)
    return (total / jnp.float32(n_elems)).astype(jnp.float32)


def huber_loss_ref(input_arr, target_arr, delta=1.0):
    x = input_arr.astype(jnp.float32)
    t = target_arr.astype(jnp.float32)
    diff = jnp.abs(x - t)
    loss = jnp.where(diff < delta, 0.5 * diff * diff,
                     delta * (diff - 0.5 * delta))
    return loss.mean()


if __name__ == "__main__":
    key = jax.random.PRNGKey(0)
    k1, k2, k3, k4 = jax.random.split(key, 4)

    # Small shapes consistent with a typical NCHW regression target.
    shape = (2, 4, 16, 16)
    x = jax.random.normal(k1, shape, dtype=jnp.float32)
    y = jax.random.normal(k2, shape, dtype=jnp.float32)
    ref = huber_loss_ref(x, y, delta=1.0)

    # 1) default (generation-aware) single/auto path
    out = jax.block_until_ready(huber_loss(x, y, delta=1.0))
    assert jnp.allclose(out, ref, rtol=1e-6, atol=1e-6), (out, ref)

    # 2) multi-step grid path (accumulation across tiles)
    out2 = jax.block_until_ready(huber_loss(x, y, delta=1.0, tile_rows=8))
    assert jnp.allclose(out2, ref, rtol=1e-6, atol=1e-6), (out2, ref)

    # 3) two-core split with an odd step count -> exercises the clamped
    #    fully-out-of-range logical step + last-tile row mask.
    xb = jax.random.normal(k3, (2, 3, 512), dtype=jnp.float32)
    yb = jax.random.normal(k4, (2, 3, 512), dtype=jnp.float32)
    ref3 = huber_loss_ref(xb, yb, delta=1.0)
    out3 = jax.block_until_ready(
        huber_loss(xb, yb, delta=1.0, tile_rows=8, num_cores=2))
    assert jnp.allclose(out3, ref3, rtol=1e-6, atol=1e-6), (out3, ref3)

    # 4) ragged element count (105 % 128 != 0) -> zero-pad path
    xa = jax.random.normal(k1, (3, 5, 7), dtype=jnp.float32)
    ya = jax.random.normal(k2, (3, 5, 7), dtype=jnp.float32)
    ref4 = huber_loss_ref(xa, ya, delta=1.0)
    out4 = jax.block_until_ready(huber_loss(xa, ya, delta=1.0))
    assert jnp.allclose(out4, ref4, rtol=1e-6, atol=1e-6), (out4, ref4)

    # 5) bf16 inputs -> packed (16,128) sublane tile rounding
    xh = jax.random.normal(k3, (4, 8, 64), dtype=jnp.float32).astype(jnp.bfloat16)
    yh = jax.random.normal(k4, (4, 8, 64), dtype=jnp.float32).astype(jnp.bfloat16)
    ref5 = huber_loss_ref(xh, yh, delta=1.0)
    out5 = jax.block_until_ready(huber_loss(xh, yh, delta=1.0, tile_rows=16))
    assert jnp.allclose(out5, ref5, rtol=1e-5, atol=1e-5), (out5, ref5)

    print("KERNEL_OK")
</pallas_src>

<mosaic_0001>
module attributes {stable_mosaic.version = 11 : i64} {
  func.func @_huber_sum_kernel(%arg0: i32, %arg1: i32, %arg2: memref<16x128xf32, #tpu.memory_space<vmem>>, %arg3: memref<16x128xf32, #tpu.memory_space<vmem>>, %arg4: memref<1x1xf32, #tpu.memory_space<vmem>>, %arg5: memref<8x128xf32, #tpu.memory_space<vmem>>) attributes {dimension_semantics = [#tpu.dimension_semantics<parallel>, #tpu.dimension_semantics<arbitrary>], iteration_bounds = array<i64: 1, 1>, scalar_prefetch = 0 : i64, scratch_operands = 1 : i64, tpu.core_type = #tpu.core_type<tc>, window_params = [{transform_indices = @transform_0, window_bounds = array<i64: 16, 128>}, {transform_indices = @transform_1, window_bounds = array<i64: 16, 128>}, {transform_indices = @transform_2, window_bounds = array<i64: 1, 1>}]} {
    %c0_i32 = arith.constant 0 : i32
    %0 = arith.cmpi eq, %arg1, %c0_i32 : i32
    %1 = arith.extui %0 : i1 to i32
    %c0_i32_0 = arith.constant 0 : i32
    %2 = arith.cmpi ne, %1, %c0_i32_0 : i32
    scf.if %2 {
      %cst_13 = arith.constant 0.000000e+00 : f32
      %24 = vector.broadcast %cst_13 : f32 to vector<8x128xf32>
      %c0_14 = arith.constant 0 : index
      %c0_15 = arith.constant 0 : index
      %25 = vector.load %arg5[%c0_14, %c0_15] : memref<8x128xf32, #tpu.memory_space<vmem>>, vector<8x128xf32>
      tpu.vector_store %arg5[%c0_14, %c0_15], %24 {strides = array<i32>} : memref<8x128xf32, #tpu.memory_space<vmem>>, vector<8x128xf32>,
    } else {
    }
    %c0 = arith.constant 0 : index
    %c0_1 = arith.constant 0 : index
    %3 = vector.load %arg2[%c0, %c0_1] : memref<16x128xf32, #tpu.memory_space<vmem>>, vector<16x128xf32>
    %c0_2 = arith.constant 0 : index
    %c0_3 = arith.constant 0 : index
    %4 = vector.load %arg3[%c0_2, %c0_3] : memref<16x128xf32, #tpu.memory_space<vmem>>, vector<16x128xf32>
    %5 = arith.subf %3, %4 : vector<16x128xf32>
    %6 = math.absf %5 : vector<16x128xf32>
    %cst = arith.constant 1.000000e+00 : f32
    %7 = vector.broadcast %cst : f32 to vector<16x128xf32>
    %8 = arith.minimumf %6, %7 : vector<16x128xf32>
    %cst_4 = arith.constant 5.000000e-01 : f32
    %9 = vector.broadcast %cst_4 : f32 to vector<16x128xf32>
    %10 = arith.mulf %9, %8 : vector<16x128xf32>
    %11 = arith.mulf %10, %8 : vector<16x128xf32>
    %12 = arith.subf %6, %8 : vector<16x128xf32>
    %cst_5 = arith.constant 1.000000e+00 : f32
    %13 = vector.broadcast %cst_5 : f32 to vector<16x128xf32>
    %14 = arith.mulf %13, %12 : vector<16x128xf32>
    %15 = arith.addf %11, %14 : vector<16x128xf32>
    %c0_6 = arith.constant 0 : index
    %c0_7 = arith.constant 0 : index
    %16 = vector.load %arg5[%c0_6, %c0_7] : memref<8x128xf32, #tpu.memory_space<vmem>>, vector<8x128xf32>
    %17 = vector.shape_cast %15 : vector<16x128xf32> to vector<2x8x128xf32>
    %cst_8 = arith.constant dense<0.000000e+00> : vector<8x128xf32>
    %18 = vector.multi_reduction <add>, %17, %cst_8 [0] : vector<2x8x128xf32> to vector<8x128xf32>
    %19 = arith.addf %16, %18 : vector<8x128xf32>
    %c0_9 = arith.constant 0 : index
    %c0_10 = arith.constant 0 : index
    %20 = vector.load %arg5[%c0_9, %c0_10] : memref<8x128xf32, #tpu.memory_space<vmem>>, vector<8x128xf32>
    tpu.vector_store %arg5[%c0_9, %c0_10], %19 {strides = array<i32>} : memref<8x128xf32, #tpu.memory_space<vmem>>, vector<8x128xf32>,
    %c0_i32_11 = arith.constant 0 : i32
    %21 = arith.cmpi eq, %arg1, %c0_i32_11 : i32
    %22 = arith.extui %21 : i1 to i32
    %c0_i32_12 = arith.constant 0 : i32
    %23 = arith.cmpi ne, %22, %c0_i32_12 : i32
    scf.if %23 {
      %c0_13 = arith.constant 0 : index
      %c0_14 = arith.constant 0 : index
      %24 = vector.load %arg5[%c0_13, %c0_14] : memref<8x128xf32, #tpu.memory_space<vmem>>, vector<8x128xf32>
      %25 = vector.shape_cast %24 : vector<8x128xf32> to vector<1x8x128xf32>
      %cst_15 = arith.constant dense<0.000000e+00> : vector<1xf32>
      %26 = vector.multi_reduction <add>, %25, %cst_15 [1, 2] : vector<1x8x128xf32> to vector<1xf32>
      %27 = vector.shape_cast %26 : vector<1xf32> to vector<1x1x1xf32>
      %28 = vector.extract %27[0, 0, 0] : f32 from vector<1x1x1xf32>
      %29 = vector.broadcast %28 : f32 to vector<1x1xf32>
      %c0_16 = arith.constant 0 : index
      %c0_17 = arith.constant 0 : index
      %30 = vector.load %arg4[%c0_16, %c0_17] : memref<1x1xf32, #tpu.memory_space<vmem>>, vector<1x1xf32>
      tpu.vector_store %arg4[%c0_16, %c0_17], %29 {strides = array<i32>} : memref<1x1xf32, #tpu.memory_space<vmem>>, vector<1x1xf32>,
    } else {
    }
    return
  }
  func.func @transform_0(%arg0: i32, %arg1: i32) -> (i32, i32) {
    %c1_i32 = arith.constant 1 : i32
    %0 = arith.muli %arg0, %c1_i32 : i32
    %1 = arith.addi %0, %arg1 : i32
    %c0_i32 = arith.constant 0 : i32
    %2 = arith.minsi %1, %c0_i32 : i32
    %c0_i32_0 = arith.constant 0 : i32
    %c0_i32_1 = arith.constant 0 : i32
    return %2, %c0_i32_0 : i32, i32
  }
  func.func @transform_1(%arg0: i32, %arg1: i32) -> (i32, i32) {
    %c1_i32 = arith.constant 1 : i32
    %0 = arith.muli %arg0, %c1_i32 : i32
    %1 = arith.addi %0, %arg1 : i32
    %c0_i32 = arith.constant 0 : i32
    %2 = arith.minsi %1, %c0_i32 : i32
    %c0_i32_0 = arith.constant 0 : i32
    %c0_i32_1 = arith.constant 0 : i32
    return %2, %c0_i32_0 : i32, i32
  }
  func.func @transform_2(%arg0: i32, %arg1: i32) -> (i32, i32) {
    %c0_i32 = arith.constant 0 : i32
    %c0_i32_0 = arith.constant 0 : i32
    return %arg0, %c0_i32 : i32, i32
  }
}

</mosaic_0001>

<llo_original>
// kernel: tpu_custom_call.1
$region0: #{tpu_custom_call.1}
  #allocation0 [shape = 'u32[]', space=smem, size = 0x4, offset = 0x4, fixed_abs, tag = 'smem constant byte address 0x4 - core index']
  #allocation1 [shape = 'u32[144,128]{1,0:T(1,128)}', space=vmem, size = 0x12000, scoped, tag = 'internal scratch']
  #allocation2 [shape = 'f32[8,128]{1,0:T(8,128)}', space=vmem, size = 0x1000, scoped, tag = 'scratch operand']
  %s0 = inlined_call_operand.hbm [shape: f32[16,128], index: 0, kind: input, shape index: {}]
  %s1 = inlined_call_operand.hbm [shape: f32[16,128], index: 1, kind: input, shape index: {}]
  %s2 = inlined_call_operand.hbm [shape: f32[1,1], index: 2, kind: output, shape index: {}]
  %s3 = sld [smem:[#allocation0]]
  $region34: #{tpu_custom_call.1} parent=0
    _
  %s5 = ssub.s32 1, %s3
  %s6 = scalar_select 0, %s5, %s3
  $region1: #{tpu_custom_call.1} parent=0
    #allocation3 [shape = 'u8[8192]{0}', space=vmem, size = 0x2000, scoped, tag = 'input window, operand 0, single buffered']
    #allocation4 [shape = 's32[1]{0}', space=sflag, size = 0x4, scoped, tag = 'scoped memory for tpu_custom_call.1']
    #allocation5 [shape = 's32[1]{0}', space=sflag, size = 0x4, scoped, tag = 'scoped memory for tpu_custom_call.1']
    #allocation6 [shape = 'u8[8192]{0}', space=vmem, size = 0x2000, scoped, tag = 'input window, operand 1, single buffered']
    #allocation7 [shape = 's32[1]{0}', space=sflag, size = 0x4, scoped, tag = 'scoped memory for tpu_custom_call.1']
    #allocation8 [shape = 'u8[512]{0}', space=vmem, size = 0x400, scoped, tag = 'output window, operand 0, single buffered']
    %7 = vsyncpa [#allocation4], 0
    %8 = vsyncpa [#allocation7], 0
    %9 = vsyncpa [#allocation5], 0
    // Predicated region
    $region2: #{tpu_custom_call.1} parent=1 // pred_check
      _
    $region3: #{tpu_custom_call.1} parent=1 // pred_check_branch
      %11 = sbr.rel (0) target = $region5
    $region4: #{tpu_custom_call.1} parent=1 // pred_region
      %s12 = sadd.s32 0, 0
      %p13 = scmp.lt.s32.totalorder %s12, 0
      %s14 = scalar_select %p13, %s12, 0
      %s15 = smul.u32 2, %s14
      %s17 = ssub.s32 256, 256
      %18 = vsyncadd [#allocation4], %s17
      %s19 = smul.addr %s15, 128
      %s20 = scalar_lea.hbm %s0, %s19
      %s21 = sshll.u32 [#allocation3], 4
      %s22 = int_to_ptr.vmem [resolvable:$true] %s21
      %27 = dma.hbm_to_vmem [thread:$0]  %s20, 256, %s22, [#allocation4], 128, 128, 8
    $region5: #{tpu_custom_call.1} parent=1 // pred_fallthru
      _
    // Predicated region
    $region6: #{tpu_custom_call.1} parent=1 // pred_check
      _
    $region7: #{tpu_custom_call.1} parent=1 // pred_check_branch
      %29 = sbr.rel (0) target = $region9
    $region8: #{tpu_custom_call.1} parent=1 // pred_region
      %s30 = sadd.s32 0, 0
      %p31 = scmp.lt.s32.totalorder %s30, 0
      %s32 = scalar_select %p31, %s30, 0
      %s33 = smul.u32 2, %s32
      %s35 = ssub.s32 256, 256
      %36 = vsyncadd [#allocation7], %s35
      %s37 = smul.addr %s33, 128
      %s38 = scalar_lea.hbm %s1, %s37
      %s39 = sshll.u32 [#allocation6], 4
      %s40 = int_to_ptr.vmem [resolvable:$true] %s39
      %45 = dma.hbm_to_vmem [thread:$0]  %s38, 256, %s40, [#allocation7], 128, 128, 8
    $region9: #{tpu_custom_call.1} parent=1 // pred_fallthru
      _
    // Predicated region
    $region10: #{tpu_custom_call.1} parent=1 // pred_check
      _
    $region11: #{tpu_custom_call.1} parent=1 // pred_check_branch
      %47 = sbr.rel (0) target = $region13
    $region12: #{tpu_custom_call.1} parent=1 // pred_region
      %48 = dma.done [#allocation4], 256
    $region13: #{tpu_custom_call.1} parent=1 // pred_fallthru
      _
    // Predicated region
    $region14: #{tpu_custom_call.1} parent=1 // pred_check
      _
    $region15: #{tpu_custom_call.1} parent=1 // pred_check_branch
      %50 = sbr.rel (0) target = $region17
    $region16: #{tpu_custom_call.1} parent=1 // pred_region
      %51 = dma.done [#allocation7], 256
    $region17: #{tpu_custom_call.1} parent=1 // pred_fallthru
      _
    %s52 = sadd.s32 0, 0
    %p53 = scmp.lt.s32.totalorder %s52, 0
    %s54 = scalar_select %p53, %s52, 0
    %s55 = smul.u32 2, %s54
    %s56 = sadd.s32 0, 0
    %p57 = scmp.lt.s32.totalorder %s56, 0
    %s58 = scalar_select %p57, %s56, 0
    %s59 = smul.u32 2, %s58
    %p60 = scmp.eq.s32.totalorder 0, 0
    // Predicated region
    $region18: #{tpu_custom_call.1} parent=1 // pred_check
      %p61 = pneg %p60
    $region19: #{tpu_custom_call.1} parent=1 // pred_check_branch
      %63 = sbr.rel (%p61) target = $region21
    $region20: #{tpu_custom_call.1} parent=1 // pred_region
      %64 = vst [vmem:[#allocation2] sm:$0xff] 0.0
    $region21: #{tpu_custom_call.1} parent=1 // pred_fallthru
      _
    %v65 = vld [vmem:[#allocation3] sm:$0xff]
    %v66 = vld [vmem:[#allocation3 + $0x8] sm:$0xff]
    %v67 = vld [vmem:[#allocation6] sm:$0xff]
    %v68 = vld [vmem:[#allocation6 + $0x8] sm:$0xff]
    %v69 = vsub.f32 %v65, %v67
    %v70 = vsub.f32 %v66, %v68
    %v71 = vand.u32 2147483647, %v69
    %v72 = vand.u32 2147483647, %v70
    %v73 = vmin.f32 %v71, 1.0
    %v74 = vmin.f32 %v72, 1.0
    %v75 = vmul.f32 %v73, 0.5
    %v76 = vmul.f32 %v74, 0.5
    %v77 = vmul.f32 %v75, %v73
    %v78 = vmul.f32 %v76, %v74
    %v79 = vsub.f32 %v71, %v73
    %v80 = vsub.f32 %v72, %v74
    %v81 = vadd.f32 %v77, %v79
    %v82 = vadd.f32 %v78, %v80
    %v83 = vld [vmem:[#allocation2] sm:$0xff]
    %v84 = vadd.f32 %v81, %v82
    %v85 = vadd.f32 %v83, %v84
    %86 = vst [vmem:[#allocation2] sm:$0xff] %v85
    // Predicated region
    $region22: #{tpu_custom_call.1} parent=1 // pred_check
      %p87 = pneg %p60
    $region23: #{tpu_custom_call.1} parent=1 // pred_check_branch
      %89 = sbr.rel (%p87) target = $region25
    $region24: #{tpu_custom_call.1} parent=1 // pred_region
      %v90 = vld [vmem:[#allocation2] sm:$0xff]
      %91 = vadd.xlane.f32.xlu0 %v90
      %v92 = vpop.xlane.xlu0 %91
      %v93 = vrot.slane %v92, 4
      %v94 = vadd.f32 %v92, %v93
      %v95 = vrot.slane %v94, 2
      %v96 = vadd.f32 %v94, %v95
      %v97 = vrot.slane %v96, 1
      %v98 = vadd.f32 %v96, %v97
      %s99 = vtos %v98
      %v100 = vstv %s99
      %vm101 = vcmask 0
      %102 = vst.msk [vmem:[#allocation8] sm:$0x1] %vm101, %v100
    $region25: #{tpu_custom_call.1} parent=1 // pred_fallthru
      _
    // Predicated region
    $region26: #{tpu_custom_call.1} parent=1 // pred_check
      _
    $region27: #{tpu_custom_call.1} parent=1 // pred_check_branch
      %104 = sbr.rel (0) target = $region29
    $region28: #{tpu_custom_call.1} parent=1 // pred_region
      %s106 = ssub.s32 16, 16
      %107 = vsyncadd [#allocation5], %s106
      %s109 = sshll.u32 [#allocation8], 4
      %s110 = int_to_ptr.vmem [resolvable:$true] %s109
      %112 = dma.vmem_to_hbm [thread:$0]  %s110, 16, %s2, [#allocation5]
    $region29: #{tpu_custom_call.1} parent=1 // pred_fallthru
      _
    // Predicated region
    $region30: #{tpu_custom_call.1} parent=1 // pred_check
      _
    $region31: #{tpu_custom_call.1} parent=1 // pred_check_branch
      %114 = sbr.rel (0) target = $region33
    $region32: #{tpu_custom_call.1} parent=1 // pred_region
      %115 = dma.done [#allocation5], 16
    $region33: #{tpu_custom_call.1} parent=1 // pred_fallthru
      _
    %116 = vsyncpa [#allocation4], 1
    %117 = vsyncpa [#allocation7], 1
    %118 = vsyncpa [#allocation5], 1

</llo_original>
